<compile_context>
chip_gen: v5e
topology: v5e:2x2
jax: 0.10.0
libtpu: 0.0.40
codegen_flags: <defaults>
</compile_context>

<pallas_src>
import math
import functools
import numpy as np
import jax
import jax.numpy as jnp
from jax.experimental import pallas as pl
from jax.experimental.pallas import tpu as pltpu


def encoder_layer_kernel(x_ref,
                         wqkv_ref, bqkv_ref,          # (E, 3E), (1, 3E)   pre-transposed+fused
                         wo_ref, bo_ref,              # (H, Dh, E), (1, E) pre-transposed, per-head
                         w1_ref, b1_ref,              # (E, FF), (1, FF)   pre-transposed
                         w2_ref, b2_ref,              # (FF, E), (1, E)    pre-transposed
                         o_ref,
                         *, nhead: int):
    # x: (S, E) for the current batch element
    x = x_ref[0].astype(jnp.float32)
    S, E = x.shape
    Dh = E // nhead
    scale = 1.0 / math.sqrt(Dh)

    # --- fused Q/K/V in-projection: one MXU matmul (weights already W^T) ---
    qkv = jnp.dot(x, wqkv_ref[...], preferred_element_type=jnp.float32) + bqkv_ref[...]

    # --- per-head scaled dot-product attention; output projection folded into
    #     a per-head accumulation (no concat, no separate Wo matmul) ---
    attn_acc = jnp.zeros((S, E), jnp.float32)
    for h in range(nhead):
        qh = qkv[:, h * Dh:(h + 1) * Dh] * scale              # (S, Dh)
        kh = qkv[:, E + h * Dh:E + (h + 1) * Dh]              # (S, Dh)
        vh = qkv[:, 2 * E + h * Dh:2 * E + (h + 1) * Dh]      # (S, Dh)

        scores = jnp.einsum('qd,kd->qk', qh, kh,
                            preferred_element_type=jnp.float32)     # (S, S)
        m = jnp.max(scores, axis=-1, keepdims=True)
        p = jnp.exp(scores - m)
        inv = pl.reciprocal(jnp.sum(p, axis=-1, keepdims=True), approx=True)  # EUP
        ctx = jnp.dot(p, vh, preferred_element_type=jnp.float32) * inv        # (S, Dh)

        # accumulate ctx_h @ Wo_h^T   (Wo_h^T prepared in wrapper as wo_ref[h])
        attn_acc = attn_acc + jnp.dot(ctx, wo_ref[h],
                                      preferred_element_type=jnp.float32)

    attn_out = attn_acc + bo_ref[...]
    src1 = x + attn_out                                        # dropout1 = identity

    # --- feed-forward: linear1 -> relu -> (dropout=id) -> linear2 + residual ---
    h1 = jnp.dot(src1, w1_ref[...], preferred_element_type=jnp.float32) + b1_ref[...]
    h1 = jnp.maximum(h1, 0.0)                                  # relu
    ffn = jnp.dot(h1, w2_ref[...], preferred_element_type=jnp.float32) + b2_ref[...]

    o_ref[0] = (src1 + ffn).astype(o_ref.dtype)                # dropout2 = identity


def transformer_encoder_layer_wonorm(src, params, nhead):
    """src: (S, B, E) float32  -> (S, B, E)   (matches PyTorch batch_first=False)."""
    S, B, E = src.shape
    FF = params["w1"].shape[0]
    Dh = E // nhead

    # --- free layout plumbing in the wrapper: pre-transpose / fuse weights once ---
    wqkv_t = jnp.concatenate(
        [params["wq"].T, params["wk"].T, params["wv"].T], axis=1)     # (E, 3E)
    bqkv = jnp.concatenate(
        [params["bq"], params["bk"], params["bv"]], axis=1)           # (1, 3E)
    wo_t_heads = params["wo"].T.reshape(nhead, Dh, E)                 # (H, Dh, E)
    w1_t = params["w1"].T                                             # (E, FF)
    w2_t = params["w2"].T                                             # (FF, E)

    x_bse = jnp.transpose(src, (1, 0, 2))                             # (B, S, E)

    full = lambda shape: pl.BlockSpec(shape, lambda b: (0,) * len(shape))

    out = pl.pallas_call(
        functools.partial(encoder_layer_kernel, nhead=nhead),
        out_shape=jax.ShapeDtypeStruct((B, S, E), src.dtype),
        grid_spec=pltpu.PrefetchScalarGridSpec(
            num_scalar_prefetch=0,
            grid=(B,),
            in_specs=[
                pl.BlockSpec((1, S, E), lambda b: (b, 0, 0)),   # x
                full((E, 3 * E)), full((1, 3 * E)),             # fused Wqkv^T, bqkv
                full((nhead, Dh, E)), full((1, E)),             # Wo^T per head, bo
                full((E, FF)), full((1, FF)),                   # W1^T, b1
                full((FF, E)), full((1, E)),                    # W2^T, b2
            ],
            out_specs=pl.BlockSpec((1, S, E), lambda b: (b, 0, 0)),
        ),
        compiler_params=pltpu.CompilerParams(
            dimension_semantics=("parallel",)),                 # shards batch on v7x
    )(x_bse,
      wqkv_t, bqkv,
      wo_t_heads, params["bo"],
      w1_t, params["b1"],
      w2_t, params["b2"])

    return jnp.transpose(out, (1, 0, 2))  # back to (S, B, E)


def reference_jax(src, params, nhead):
    """Pure-JAX reference mirroring PyTorch semantics (eval mode)."""
    S, B, E = src.shape
    Dh = E // nhead
    x = src.astype(jnp.float32)  # (S, B, E)

    q = jnp.einsum("sbe,fe->sbf", x, params["wq"]) + params["bq"][0]
    k = jnp.einsum("sbe,fe->sbf", x, params["wk"]) + params["bk"][0]
    v = jnp.einsum("sbe,fe->sbf", x, params["wv"]) + params["bv"][0]

    def split(t):  # (S,B,E) -> (B,H,S,Dh)
        return jnp.transpose(t.reshape(S, B, nhead, Dh), (1, 2, 0, 3))

    qh, kh, vh = split(q) / math.sqrt(Dh), split(k), split(v)
    scores = jnp.einsum("bhqd,bhkd->bhqk", qh, kh)
    attn = jax.nn.softmax(scores, axis=-1)
    ctx = jnp.einsum("bhqk,bhkd->bhqd", attn, vh)          # (B,H,S,Dh)
    ctx = jnp.transpose(ctx, (2, 0, 1, 3)).reshape(S, B, E)
    attn_out = jnp.einsum("sbe,fe->sbf", ctx, params["wo"]) + params["bo"][0]

    src1 = x + attn_out
    h1 = jax.nn.relu(jnp.einsum("sbe,fe->sbf", src1, params["w1"]) + params["b1"][0])
    ffn = jnp.einsum("sbf,ef->sbe", h1, params["w2"]) + params["b2"][0]
    return src1 + ffn


def init_params(key, d_model, nhead, dim_feedforward):
    ks = jax.random.split(key, 10)
    s = 0.1
    p = {
        "wq": s * jax.random.normal(ks[0], (d_model, d_model), jnp.float32),
        "wk": s * jax.random.normal(ks[1], (d_model, d_model), jnp.float32),
        "wv": s * jax.random.normal(ks[2], (d_model, d_model), jnp.float32),
        "bq": s * jax.random.normal(ks[3], (1, d_model), jnp.float32),
        "bk": s * jax.random.normal(ks[4], (1, d_model), jnp.float32),
        "bv": s * jax.random.normal(ks[5], (1, d_model), jnp.float32),
        "wo": s * jax.random.normal(ks[6], (d_model, d_model), jnp.float32),
        "bo": jnp.zeros((1, d_model), jnp.float32),
        "w1": s * jax.random.normal(ks[7], (dim_feedforward, d_model), jnp.float32),
        "b1": s * jax.random.normal(ks[8], (1, dim_feedforward), jnp.float32),
        "w2": s * jax.random.normal(ks[9], (d_model, dim_feedforward), jnp.float32),
        "b2": jnp.zeros((1, d_model), jnp.float32),
    }
    return p


if __name__ == "__main__":
    # small shapes consistent with the module: seq=8, batch=2, d_model=32, nhead=4, ff=64
    S, B, E, H, FF = 8, 2, 32, 4, 64

    key = jax.random.PRNGKey(0)
    k_src, k_par = jax.random.split(key)
    src = jax.random.normal(k_src, (S, B, E), jnp.float32)   # PyTorch layout (S, B, E)
    params = init_params(k_par, E, H, FF)

    out = transformer_encoder_layer_wonorm(src, params, H)
    out = jax.block_until_ready(out)

    ref = jax.block_until_ready(reference_jax(src, params, H))
    # tolerance slightly loosened because the kernel uses the EUP approximate
    # reciprocal for the softmax denominator (pl.reciprocal(..., approx=True)).
    np.testing.assert_allclose(np.asarray(out), np.asarray(ref), rtol=2e-3, atol=2e-3)

    print("KERNEL_OK")
</pallas_src>

<mosaic_0001>
module attributes {stable_mosaic.version = 11 : i64} {
  func.func @encoder_layer_kernel(%arg0: i32, %arg1: memref<1x8x32xf32, #tpu.memory_space<vmem>>, %arg2: memref<32x96xf32, #tpu.memory_space<vmem>>, %arg3: memref<1x96xf32, #tpu.memory_space<vmem>>, %arg4: memref<4x8x32xf32, #tpu.memory_space<vmem>>, %arg5: memref<1x32xf32, #tpu.memory_space<vmem>>, %arg6: memref<32x64xf32, #tpu.memory_space<vmem>>, %arg7: memref<1x64xf32, #tpu.memory_space<vmem>>, %arg8: memref<64x32xf32, #tpu.memory_space<vmem>>, %arg9: memref<1x32xf32, #tpu.memory_space<vmem>>, %arg10: memref<1x8x32xf32, #tpu.memory_space<vmem>>) attributes {dimension_semantics = [#tpu.dimension_semantics<parallel>], iteration_bounds = array<i64: 2>, scalar_prefetch = 0 : i64, scratch_operands = 0 : i64, tpu.core_type = #tpu.core_type<tc>, window_params = [{transform_indices = @transform_0, window_bounds = array<i64: 1, 8, 32>}, {pipeline_mode = #tpu.pipeline_mode<synchronous>, transform_indices = @transform_1, window_bounds = array<i64: 32, 96>}, {pipeline_mode = #tpu.pipeline_mode<synchronous>, transform_indices = @transform_2, window_bounds = array<i64: 1, 96>}, {pipeline_mode = #tpu.pipeline_mode<synchronous>, transform_indices = @transform_3, window_bounds = array<i64: 4, 8, 32>}, {pipeline_mode = #tpu.pipeline_mode<synchronous>, transform_indices = @transform_4, window_bounds = array<i64: 1, 32>}, {pipeline_mode = #tpu.pipeline_mode<synchronous>, transform_indices = @transform_5, window_bounds = array<i64: 32, 64>}, {pipeline_mode = #tpu.pipeline_mode<synchronous>, transform_indices = @transform_6, window_bounds = array<i64: 1, 64>}, {pipeline_mode = #tpu.pipeline_mode<synchronous>, transform_indices = @transform_7, window_bounds = array<i64: 64, 32>}, {pipeline_mode = #tpu.pipeline_mode<synchronous>, transform_indices = @transform_8, window_bounds = array<i64: 1, 32>}, {transform_indices = @transform_9, window_bounds = array<i64: 1, 8, 32>}]} {
    %c0 = arith.constant 0 : index
    %c0_0 = arith.constant 0 : index
    %c0_1 = arith.constant 0 : index
    %0 = vector.load %arg1[%c0, %c0_0, %c0_1] : memref<1x8x32xf32, #tpu.memory_space<vmem>>, vector<1x8x32xf32>
    %1 = vector.shape_cast %0 : vector<1x8x32xf32> to vector<8x32xf32>
    %c0_2 = arith.constant 0 : index
    %c0_3 = arith.constant 0 : index
    %2 = vector.load %arg2[%c0_2, %c0_3] : memref<32x96xf32, #tpu.memory_space<vmem>>, vector<32x96xf32>
    %cst = arith.constant dense<0.000000e+00> : vector<8x96xf32>
    %3 = tpu.matmul %1, %2, %cst {dimension_numbers = #tpu.dot_dimension_numbers<[1], [0], [0], [1], [0, 0, 1, 1], [], []>} : vector<8x32xf32>, vector<32x96xf32>, vector<8x96xf32> -> vector<8x96xf32>
    %c0_4 = arith.constant 0 : index
    %c0_5 = arith.constant 0 : index
    %4 = vector.load %arg3[%c0_4, %c0_5] : memref<1x96xf32, #tpu.memory_space<vmem>>, vector<1x96xf32>
    %5 = vector.broadcast %4 : vector<1x96xf32> to vector<8x96xf32>
    %6 = arith.addf %3, %5 : vector<8x96xf32>
    %cst_6 = arith.constant 0.000000e+00 : f32
    %7 = vector.broadcast %cst_6 : f32 to vector<8x32xf32>
    %8 = vector.extract_strided_slice %6 {offsets = [0, 0], sizes = [8, 8], strides = [1, 1]} : vector<8x96xf32> to vector<8x8xf32>
    %cst_7 = arith.constant 0.353553385 : f32
    %9 = vector.broadcast %cst_7 : f32 to vector<8x8xf32>
    %10 = arith.mulf %8, %9 : vector<8x8xf32>
    %11 = vector.extract_strided_slice %6 {offsets = [0, 32], sizes = [8, 8], strides = [1, 1]} : vector<8x96xf32> to vector<8x8xf32>
    %12 = vector.extract_strided_slice %6 {offsets = [0, 64], sizes = [8, 8], strides = [1, 1]} : vector<8x96xf32> to vector<8x8xf32>
    "tpu.trace_start"() <{level = 10 : i32, message = "qd,kd->qk"}> : () -> ()
    %cst_8 = arith.constant dense<0.000000e+00> : vector<8x8xf32>
    %13 = tpu.matmul %10, %11, %cst_8 {dimension_numbers = #tpu.dot_dimension_numbers<[1], [1], [0], [0], [0, 0, 1, 0], [], []>} : vector<8x8xf32>, vector<8x8xf32>, vector<8x8xf32> -> vector<8x8xf32>
    "tpu.trace_stop"() : () -> ()
    %cst_9 = arith.constant dense<0xFF800000> : vector<8xf32>
    %14 = vector.multi_reduction <maximumf>, %13, %cst_9 [1] : vector<8x8xf32> to vector<8xf32>
    %15 = vector.shape_cast %14 : vector<8xf32> to vector<8x1xf32>
    %16 = vector.broadcast %15 : vector<8x1xf32> to vector<8x8xf32>
    %17 = arith.subf %13, %16 : vector<8x8xf32>
    %18 = math.exp %17 : vector<8x8xf32>
    %cst_10 = arith.constant dense<0.000000e+00> : vector<8xf32>
    %19 = vector.multi_reduction <add>, %18, %cst_10 [1] : vector<8x8xf32> to vector<8xf32>
    %20 = vector.shape_cast %19 : vector<8xf32> to vector<8x1xf32>
    %21 = tpu.reciprocal %20 {approx = true} : vector<8x1xf32> -> vector<8x1xf32>
    %cst_11 = arith.constant dense<0.000000e+00> : vector<8x8xf32>
    %22 = tpu.matmul %18, %12, %cst_11 {dimension_numbers = #tpu.dot_dimension_numbers<[1], [0], [0], [1], [0, 0, 1, 1], [], []>} : vector<8x8xf32>, vector<8x8xf32>, vector<8x8xf32> -> vector<8x8xf32>
    %23 = vector.broadcast %21 : vector<8x1xf32> to vector<8x8xf32>
    %24 = arith.mulf %22, %23 : vector<8x8xf32>
    %c0_12 = arith.constant 0 : index
    %c0_13 = arith.constant 0 : index
    %c0_14 = arith.constant 0 : index
    %25 = vector.load %arg4[%c0_12, %c0_13, %c0_14] : memref<4x8x32xf32, #tpu.memory_space<vmem>>, vector<1x8x32xf32>
    %26 = vector.shape_cast %25 : vector<1x8x32xf32> to vector<8x32xf32>
    %cst_15 = arith.constant dense<0.000000e+00> : vector<8x32xf32>
    %27 = tpu.matmul %24, %26, %cst_15 {dimension_numbers = #tpu.dot_dimension_numbers<[1], [0], [0], [1], [0, 0, 1, 1], [], []>} : vector<8x8xf32>, vector<8x32xf32>, vector<8x32xf32> -> vector<8x32xf32>
    %28 = arith.addf %7, %27 : vector<8x32xf32>
    %29 = vector.extract_strided_slice %6 {offsets = [0, 8], sizes = [8, 8], strides = [1, 1]} : vector<8x96xf32> to vector<8x8xf32>
    %cst_16 = arith.constant 0.353553385 : f32
    %30 = vector.broadcast %cst_16 : f32 to vector<8x8xf32>
    %31 = arith.mulf %29, %30 : vector<8x8xf32>
    %32 = vector.extract_strided_slice %6 {offsets = [0, 40], sizes = [8, 8], strides = [1, 1]} : vector<8x96xf32> to vector<8x8xf32>
    %33 = vector.extract_strided_slice %6 {offsets = [0, 72], sizes = [8, 8], strides = [1, 1]} : vector<8x96xf32> to vector<8x8xf32>
    "tpu.trace_start"() <{level = 10 : i32, message = "qd,kd->qk"}> : () -> ()
    %cst_17 = arith.constant dense<0.000000e+00> : vector<8x8xf32>
    %34 = tpu.matmul %31, %32, %cst_17 {dimension_numbers = #tpu.dot_dimension_numbers<[1], [1], [0], [0], [0, 0, 1, 0], [], []>} : vector<8x8xf32>, vector<8x8xf32>, vector<8x8xf32> -> vector<8x8xf32>
    "tpu.trace_stop"() : () -> ()
    %cst_18 = arith.constant dense<0xFF800000> : vector<8xf32>
    %35 = vector.multi_reduction <maximumf>, %34, %cst_18 [1] : vector<8x8xf32> to vector<8xf32>
    %36 = vector.shape_cast %35 : vector<8xf32> to vector<8x1xf32>
    %37 = vector.broadcast %36 : vector<8x1xf32> to vector<8x8xf32>
    %38 = arith.subf %34, %37 : vector<8x8xf32>
    %39 = math.exp %38 : vector<8x8xf32>
    %cst_19 = arith.constant dense<0.000000e+00> : vector<8xf32>
    %40 = vector.multi_reduction <add>, %39, %cst_19 [1] : vector<8x8xf32> to vector<8xf32>
    %41 = vector.shape_cast %40 : vector<8xf32> to vector<8x1xf32>
    %42 = tpu.reciprocal %41 {approx = true} : vector<8x1xf32> -> vector<8x1xf32>
    %cst_20 = arith.constant dense<0.000000e+00> : vector<8x8xf32>
    %43 = tpu.matmul %39, %33, %cst_20 {dimension_numbers = #tpu.dot_dimension_numbers<[1], [0], [0], [1], [0, 0, 1, 1], [], []>} : vector<8x8xf32>, vector<8x8xf32>, vector<8x8xf32> -> vector<8x8xf32>
    %44 = vector.broadcast %42 : vector<8x1xf32> to vector<8x8xf32>
    %45 = arith.mulf %43, %44 : vector<8x8xf32>
    %c1 = arith.constant 1 : index
    %c0_21 = arith.constant 0 : index
    %c0_22 = arith.constant 0 : index
    %46 = vector.load %arg4[%c1, %c0_21, %c0_22] : memref<4x8x32xf32, #tpu.memory_space<vmem>>, vector<1x8x32xf32>
    %47 = vector.shape_cast %46 : vector<1x8x32xf32> to vector<8x32xf32>
    %cst_23 = arith.constant dense<0.000000e+00> : vector<8x32xf32>
    %48 = tpu.matmul %45, %47, %cst_23 {dimension_numbers = #tpu.dot_dimension_numbers<[1], [0], [0], [1], [0, 0, 1, 1], [], []>} : vector<8x8xf32>, vector<8x32xf32>, vector<8x32xf32> -> vector<8x32xf32>
    %49 = arith.addf %28, %48 : vector<8x32xf32>
    %50 = vector.extract_strided_slice %6 {offsets = [0, 16], sizes = [8, 8], strides = [1, 1]} : vector<8x96xf32> to vector<8x8xf32>
    %cst_24 = arith.constant 0.353553385 : f32
    %51 = vector.broadcast %cst_24 : f32 to vector<8x8xf32>
    %52 = arith.mulf %50, %51 : vector<8x8xf32>
    %53 = vector.extract_strided_slice %6 {offsets = [0, 48], sizes = [8, 8], strides = [1, 1]} : vector<8x96xf32> to vector<8x8xf32>
    %54 = vector.extract_strided_slice %6 {offsets = [0, 80], sizes = [8, 8], strides = [1, 1]} : vector<8x96xf32> to vector<8x8xf32>
    "tpu.trace_start"() <{level = 10 : i32, message = "qd,kd->qk"}> : () -> ()
    %cst_25 = arith.constant dense<0.000000e+00> : vector<8x8xf32>
    %55 = tpu.matmul %52, %53, %cst_25 {dimension_numbers = #tpu.dot_dimension_numbers<[1], [1], [0], [0], [0, 0, 1, 0], [], []>} : vector<8x8xf32>, vector<8x8xf32>, vector<8x8xf32> -> vector<8x8xf32>
    "tpu.trace_stop"() : () -> ()
    %cst_26 = arith.constant dense<0xFF800000> : vector<8xf32>
    %56 = vector.multi_reduction <maximumf>, %55, %cst_26 [1] : vector<8x8xf32> to vector<8xf32>
    %57 = vector.shape_cast %56 : vector<8xf32> to vector<8x1xf32>
    %58 = vector.broadcast %57 : vector<8x1xf32> to vector<8x8xf32>
    %59 = arith.subf %55, %58 : vector<8x8xf32>
    %60 = math.exp %59 : vector<8x8xf32>
    %cst_27 = arith.constant dense<0.000000e+00> : vector<8xf32>
    %61 = vector.multi_reduction <add>, %60, %cst_27 [1] : vector<8x8xf32> to vector<8xf32>
    %62 = vector.shape_cast %61 : vector<8xf32> to vector<8x1xf32>
    %63 = tpu.reciprocal %62 {approx = true} : vector<8x1xf32> -> vector<8x1xf32>
    %cst_28 = arith.constant dense<0.000000e+00> : vector<8x8xf32>
    %64 = tpu.matmul %60, %54, %cst_28 {dimension_numbers = #tpu.dot_dimension_numbers<[1], [0], [0], [1], [0, 0, 1, 1], [], []>} : vector<8x8xf32>, vector<8x8xf32>, vector<8x8xf32> -> vector<8x8xf32>
    %65 = vector.broadcast %63 : vector<8x1xf32> to vector<8x8xf32>
    %66 = arith.mulf %64, %65 : vector<8x8xf32>
    %c2 = arith.constant 2 : index
    %c0_29 = arith.constant 0 : index
    %c0_30 = arith.constant 0 : index
    %67 = vector.load %arg4[%c2, %c0_29, %c0_30] : memref<4x8x32xf32, #tpu.memory_space<vmem>>, vector<1x8x32xf32>
    %68 = vector.shape_cast %67 : vector<1x8x32xf32> to vector<8x32xf32>
    %cst_31 = arith.constant dense<0.000000e+00> : vector<8x32xf32>
    %69 = tpu.matmul %66, %68, %cst_31 {dimension_numbers = #tpu.dot_dimension_numbers<[1], [0], [0], [1], [0, 0, 1, 1], [], []>} : vector<8x8xf32>, vector<8x32xf32>, vector<8x32xf32> -> vector<8x32xf32>
    %70 = arith.addf %49, %69 : vector<8x32xf32>
    %71 = vector.extract_strided_slice %6 {offsets = [0, 24], sizes = [8, 8], strides = [1, 1]} : vector<8x96xf32> to vector<8x8xf32>
    %cst_32 = arith.constant 0.353553385 : f32
    %72 = vector.broadcast %cst_32 : f32 to vector<8x8xf32>
    %73 = arith.mulf %71, %72 : vector<8x8xf32>
    %74 = vector.extract_strided_slice %6 {offsets = [0, 56], sizes = [8, 8], strides = [1, 1]} : vector<8x96xf32> to vector<8x8xf32>
    %75 = vector.extract_strided_slice %6 {offsets = [0, 88], sizes = [8, 8], strides = [1, 1]} : vector<8x96xf32> to vector<8x8xf32>
    "tpu.trace_start"() <{level = 10 : i32, message = "qd,kd->qk"}> : () -> ()
    %cst_33 = arith.constant dense<0.000000e+00> : vector<8x8xf32>
    %76 = tpu.matmul %73, %74, %cst_33 {dimension_numbers = #tpu.dot_dimension_numbers<[1], [1], [0], [0], [0, 0, 1, 0], [], []>} : vector<8x8xf32>, vector<8x8xf32>, vector<8x8xf32> -> vector<8x8xf32>
    "tpu.trace_stop"() : () -> ()
    %cst_34 = arith.constant dense<0xFF800000> : vector<8xf32>
    %77 = vector.multi_reduction <maximumf>, %76, %cst_34 [1] : vector<8x8xf32> to vector<8xf32>
    %78 = vector.shape_cast %77 : vector<8xf32> to vector<8x1xf32>
    %79 = vector.broadcast %78 : vector<8x1xf32> to vector<8x8xf32>
    %80 = arith.subf %76, %79 : vector<8x8xf32>
    %81 = math.exp %80 : vector<8x8xf32>
    %cst_35 = arith.constant dense<0.000000e+00> : vector<8xf32>
    %82 = vector.multi_reduction <add>, %81, %cst_35 [1] : vector<8x8xf32> to vector<8xf32>
    %83 = vector.shape_cast %82 : vector<8xf32> to vector<8x1xf32>
    %84 = tpu.reciprocal %83 {approx = true} : vector<8x1xf32> -> vector<8x1xf32>
    %cst_36 = arith.constant dense<0.000000e+00> : vector<8x8xf32>
    %85 = tpu.matmul %81, %75, %cst_36 {dimension_numbers = #tpu.dot_dimension_numbers<[1], [0], [0], [1], [0, 0, 1, 1], [], []>} : vector<8x8xf32>, vector<8x8xf32>, vector<8x8xf32> -> vector<8x8xf32>
    %86 = vector.broadcast %84 : vector<8x1xf32> to vector<8x8xf32>
    %87 = arith.mulf %85, %86 : vector<8x8xf32>
    %c3 = arith.constant 3 : index
    %c0_37 = arith.constant 0 : index
    %c0_38 = arith.constant 0 : index
    %88 = vector.load %arg4[%c3, %c0_37, %c0_38] : memref<4x8x32xf32, #tpu.memory_space<vmem>>, vector<1x8x32xf32>
    %89 = vector.shape_cast %88 : vector<1x8x32xf32> to vector<8x32xf32>
    %cst_39 = arith.constant dense<0.000000e+00> : vector<8x32xf32>
    %90 = tpu.matmul %87, %89, %cst_39 {dimension_numbers = #tpu.dot_dimension_numbers<[1], [0], [0], [1], [0, 0, 1, 1], [], []>} : vector<8x8xf32>, vector<8x32xf32>, vector<8x32xf32> -> vector<8x32xf32>
    %91 = arith.addf %70, %90 : vector<8x32xf32>
    %c0_40 = arith.constant 0 : index
    %c0_41 = arith.constant 0 : index
    %92 = vector.load %arg5[%c0_40, %c0_41] : memref<1x32xf32, #tpu.memory_space<vmem>>, vector<1x32xf32>
    %93 = vector.broadcast %92 : vector<1x32xf32> to vector<8x32xf32>
    %94 = arith.addf %91, %93 : vector<8x32xf32>
    %95 = arith.addf %1, %94 : vector<8x32xf32>
    %c0_42 = arith.constant 0 : index
    %c0_43 = arith.constant 0 : index
    %96 = vector.load %arg6[%c0_42, %c0_43] : memref<32x64xf32, #tpu.memory_space<vmem>>, vector<32x64xf32>
    %cst_44 = arith.constant dense<0.000000e+00> : vector<8x64xf32>
    %97 = tpu.matmul %95, %96, %cst_44 {dimension_numbers = #tpu.dot_dimension_numbers<[1], [0], [0], [1], [0, 0, 1, 1], [], []>} : vector<8x32xf32>, vector<32x64xf32>, vector<8x64xf32> -> vector<8x64xf32>
    %c0_45 = arith.constant 0 : index
    %c0_46 = arith.constant 0 : index
    %98 = vector.load %arg7[%c0_45, %c0_46] : memref<1x64xf32, #tpu.memory_space<vmem>>, vector<1x64xf32>
    %99 = vector.broadcast %98 : vector<1x64xf32> to vector<8x64xf32>
    %100 = arith.addf %97, %99 : vector<8x64xf32>
    %cst_47 = arith.constant 0.000000e+00 : f32
    %101 = vector.broadcast %cst_47 : f32 to vector<8x64xf32>
    %102 = arith.maximumf %100, %101 : vector<8x64xf32>
    %c0_48 = arith.constant 0 : index
    %c0_49 = arith.constant 0 : index
    %103 = vector.load %arg8[%c0_48, %c0_49] : memref<64x32xf32, #tpu.memory_space<vmem>>, vector<64x32xf32>
    %cst_50 = arith.constant dense<0.000000e+00> : vector<8x32xf32>
    %104 = tpu.matmul %102, %103, %cst_50 {dimension_numbers = #tpu.dot_dimension_numbers<[1], [0], [0], [1], [0, 0, 1, 1], [], []>} : vector<8x64xf32>, vector<64x32xf32>, vector<8x32xf32> -> vector<8x32xf32>
    %c0_51 = arith.constant 0 : index
    %c0_52 = arith.constant 0 : index
    %105 = vector.load %arg9[%c0_51, %c0_52] : memref<1x32xf32, #tpu.memory_space<vmem>>, vector<1x32xf32>
    %106 = vector.broadcast %105 : vector<1x32xf32> to vector<8x32xf32>
    %107 = arith.addf %104, %106 : vector<8x32xf32>
    %108 = arith.addf %95, %107 : vector<8x32xf32>
    %c0_53 = arith.constant 0 : index
    %c0_54 = arith.constant 0 : index
    %c0_55 = arith.constant 0 : index
    %109 = vector.load %arg10[%c0_53, %c0_54, %c0_55] : memref<1x8x32xf32, #tpu.memory_space<vmem>>, vector<1x8x32xf32>
    %110 = vector.shape_cast %109 : vector<1x8x32xf32> to vector<8x32xf32>
    %111 = vector.shape_cast %108 : vector<8x32xf32> to vector<1x8x32xf32>
    tpu.vector_store %arg10[%c0_53, %c0_54, %c0_55], %111 {strides = array<i32>} : memref<1x8x32xf32, #tpu.memory_space<vmem>>, vector<1x8x32xf32>,
    return
  }
  func.func @transform_0(%arg0: i32) -> (i32, i32, i32) {
    %c0_i32 = arith.constant 0 : i32
    %c0_i32_0 = arith.constant 0 : i32
    %c0_i32_1 = arith.constant 0 : i32
    return %arg0, %c0_i32, %c0_i32_0 : i32, i32, i32
  }
  func.func @transform_1(%arg0: i32) -> (i32, i32) {
    %c0_i32 = arith.constant 0 : i32
    %c0_i32_0 = arith.constant 0 : i32
    %c0_i32_1 = arith.constant 0 : i32
    return %c0_i32, %c0_i32_0 : i32, i32
  }
  func.func @transform_2(%arg0: i32) -> (i32, i32) {
    %c0_i32 = arith.constant 0 : i32
    %c0_i32_0 = arith.constant 0 : i32
    %c0_i32_1 = arith.constant 0 : i32
    return %c0_i32, %c0_i32_0 : i32, i32
  }
  func.func @transform_3(%arg0: i32) -> (i32, i32, i32) {
    %c0_i32 = arith.constant 0 : i32
    %c0_i32_0 = arith.constant 0 : i32
    %c0_i32_1 = arith.constant 0 : i32
    %c0_i32_2 = arith.constant 0 : i32
    return %c0_i32, %c0_i32_0, %c0_i32_1 : i32, i32, i32
  }
  func.func @transform_4(%arg0: i32) -> (i32, i32) {
    %c0_i32 = arith.constant 0 : i32
    %c0_i32_0 = arith.constant 0 : i32
    %c0_i32_1 = arith.constant 0 : i32
    return %c0_i32, %c0_i32_0 : i32, i32
  }
  func.func @transform_5(%arg0: i32) -> (i32, i32) {
    %c0_i32 = arith.constant 0 : i32
    %c0_i32_0 = arith.constant 0 : i32
    %c0_i32_1 = arith.constant 0 : i32
    return %c0_i32, %c0_i32_0 : i32, i32
  }
  func.func @transform_6(%arg0: i32) -> (i32, i32) {
    %c0_i32 = arith.constant 0 : i32
    %c0_i32_0 = arith.constant 0 : i32
    %c0_i32_1 = arith.constant 0 : i32
    return %c0_i32, %c0_i32_0 : i32, i32
  }
  func.func @transform_7(%arg0: i32) -> (i32, i32) {
    %c0_i32 = arith.constant 0 : i32
    %c0_i32_0 = arith.constant 0 : i32
    %c0_i32_1 = arith.constant 0 : i32
    return %c0_i32, %c0_i32_0 : i32, i32
  }
  func.func @transform_8(%arg0: i32) -> (i32, i32) {
    %c0_i32 = arith.constant 0 : i32
    %c0_i32_0 = arith.constant 0 : i32
    %c0_i32_1 = arith.constant 0 : i32
    return %c0_i32, %c0_i32_0 : i32, i32
  }
  func.func @transform_9(%arg0: i32) -> (i32, i32, i32) {
    %c0_i32 = arith.constant 0 : i32
    %c0_i32_0 = arith.constant 0 : i32
    %c0_i32_1 = arith.constant 0 : i32
    return %arg0, %c0_i32, %c0_i32_0 : i32, i32, i32
  }
}

</mosaic_0001>

<llo_original>
// kernel: tpu_custom_call.1
$region0: #{tpu_custom_call.1}
  #allocation0 [shape = 'u32[]', space=smem, size = 0x4, offset = 0x4, fixed_abs, tag = 'smem constant byte address 0x4 - core index']
  #allocation1 [shape = 'u32[72,128]{1,0:T(1,128)}', space=vmem, size = 0x9000, scoped, tag = 'internal scratch']
  %s0 = inlined_call_operand.hbm [shape: f32[2,8,32], index: 0, kind: input, shape index: {}]
  %s1 = inlined_call_operand.vmem [shape: f32[32,96], index: 1, kind: input, shape index: {}]
  %s2 = inlined_call_operand.vmem [shape: f32[1,96], index: 2, kind: input, shape index: {}]
  %s3 = inlined_call_operand.vmem [shape: f32[4,8,32], index: 3, kind: input, shape index: {}]
  %s4 = inlined_call_operand.vmem [shape: f32[1,32], index: 4, kind: input, shape index: {}]
  %s5 = inlined_call_operand.vmem [shape: f32[32,64], index: 5, kind: input, shape index: {}]
  %s6 = inlined_call_operand.vmem [shape: f32[1,64], index: 6, kind: input, shape index: {}]
  %s7 = inlined_call_operand.vmem [shape: f32[64,32], index: 7, kind: input, shape index: {}]
  %s8 = inlined_call_operand.vmem [shape: f32[1,32], index: 8, kind: input, shape index: {}]
  %s9 = inlined_call_operand.hbm [shape: f32[2,8,32], index: 9, kind: output, shape index: {}]
  %s10 = sld [smem:[#allocation0]]
  $region73: #{tpu_custom_call.1} parent=0
    _
  %s12 = ssub.s32 1, %s10
  %s13 = scalar_select 0, %s12, %s10
  $region1: #{tpu_custom_call.1} parent=0
    #allocation2 [shape = 'u8[8192]{0}', space=vmem, size = 0x2000, scoped, tag = 'input window, operand 0']
    #allocation3 [shape = 's32[2]{0}', space=sflag, size = 0x8, scoped, tag = 'scoped memory for tpu_custom_call.1']
    #allocation4 [shape = 's32[2]{0}', space=sflag, size = 0x8, scoped, tag = 'scoped memory for tpu_custom_call.1']
    #allocation5 [shape = 'u8[8192]{0}', space=vmem, size = 0x2000, scoped, tag = 'output window, operand 0']
    %14 = vsyncpa [#allocation3], 0
    %s15 = scalar_lea.sflag [#allocation3], 1
    %16 = vsyncpa %s15, 0
    %17 = vsyncpa [#allocation4], 0
    %s18 = scalar_lea.sflag [#allocation4], 1
    %19 = vsyncpa %s18, 0
    loop: start=0, step=1, limit=4
    $region2: #{tpu_custom_call.1} parent=1 // loop_pre_header
      _
    $region3: #{tpu_custom_call.1} parent=1 // loop_header
      %s21 = sphi 0, %s25
      %p22 = scmp.ge.s32.totalorder %s21, 4
      %s31 = sphi 0, %s33
      %s34 = sphi 0, %s31
      %s35 = sphi 0, %s34
      %s51 = sphi 0, %s35
      %s55 = sphi 0, %s55
      %s57 = sphi 0, %s55
      %s58 = sphi 0, %s57
      %s72 = sphi 0, %s58
      %s76 = sphi 0, %s76
      %s78 = sphi 0, %s76
      %s79 = sphi 0, %s78
      %s93 = sphi 0, %s79
      %s97 = sphi 0, %s97
      %s99 = sphi 0, %s97
      %s100 = sphi 0, %s99
      %s114 = sphi 0, %s100
      %s118 = sphi 0, %s118
      %s120 = sphi 0, %s118
      %s121 = sphi 0, %s120
      %s135 = sphi 0, %s121
      %s139 = sphi 0, %s139
      %s141 = sphi 0, %s139
      %s142 = sphi 0, %s141
      %s156 = sphi 0, %s142
      %s160 = sphi 0, %s160
      %s162 = sphi 0, %s160
      %s163 = sphi 0, %s162
      %s177 = sphi 0, %s163
      %s181 = sphi 0, %s181
      %s183 = sphi 0, %s181
      %s184 = sphi 0, %s183
      %s198 = sphi 0, %s184
      %s202 = sphi 0, %s202
      %s204 = sphi 0, %s202
      %s205 = sphi 0, %s204
      %s219 = sphi 0, %s205
      %s225 = sphi 0, %s227
      %s228 = sphi 0, %s225
      %s229 = sphi 0, %s228
      %s245 = sphi 0, %s229
    $region4: #{tpu_custom_call.1} parent=1 // loop_header_branch
      %24 = sbr.rel (%p22) target = $region8
    $region5: #{tpu_custom_call.1} parent=1 // loop_body
      %s26 = ssub.s32 %s21, 1
      %s27 = ssub.s32 %s21, 2
      %s28 = sadd.s32 %s21, 1
      %s29 = ssub.s32 %s21, %s28
      %p30 = scmp.eq.s32.totalorder %s29, 0
      %s32 = sadd.s32 %s31, 1
      %s33 = scalar_select %p30, %s31, %s32
      %p36 = pneg %p30
      %p37 = scmp.eq.s32.totalorder %s21, 1
      %p38 = por %p36, %p37
      %p39 = scmp.ne.s32.totalorder %s31, %s34
      %p40 = scmp.eq.s32.totalorder %s21, 0
      %p41 = por %p39, %p40
      %p42 = scmp.ne.s32.totalorder %s31, %s34
      %p43 = scmp.eq.s32.totalorder %s26, 1
      %p44 = por %p42, %p43
      %p45 = scmp.ne.s32.totalorder %s34, %s35
      %p46 = scmp.eq.s32.totalorder %s26, 0
      %p47 = por %p45, %p46
      %p48 = scmp.ne.s32.totalorder %s34, %s35
      %p49 = scmp.eq.s32.totalorder %s27, 1
      %p50 = por %p48, %p49
      %p52 = scmp.ne.s32.totalorder %s35, %s51
      %p53 = scmp.eq.s32.totalorder %s27, 0
      %p54 = por %p52, %p53
      %s56 = sadd.s32 %s55, 1
      %p59 = scmp.eq.s32.totalorder %s21, 1
      %p60 = scmp.ne.s32.totalorder %s55, %s57
      %p61 = scmp.eq.s32.totalorder %s21, 0
      %p62 = por %p60, %p61
      %p63 = scmp.ne.s32.totalorder %s55, %s57
      %p64 = scmp.eq.s32.totalorder %s26, 1
      %p65 = por %p63, %p64
      %p66 = scmp.ne.s32.totalorder %s57, %s58
      %p67 = scmp.eq.s32.totalorder %s26, 0
      %p68 = por %p66, %p67
      %p69 = scmp.ne.s32.totalorder %s57, %s58
      %p70 = scmp.eq.s32.totalorder %s27, 1
      %p71 = por %p69, %p70
      %p73 = scmp.ne.s32.totalorder %s58, %s72
      %p74 = scmp.eq.s32.totalorder %s27, 0
      %p75 = por %p73, %p74
      %s77 = sadd.s32 %s76, 1
      %p80 = scmp.eq.s32.totalorder %s21, 1
      %p81 = scmp.ne.s32.totalorder %s76, %s78
      %p82 = scmp.eq.s32.totalorder %s21, 0
      %p83 = por %p81, %p82
      %p84 = scmp.ne.s32.totalorder %s76, %s78
      %p85 = scmp.eq.s32.totalorder %s26, 1
      %p86 = por %p84, %p85
      %p87 = scmp.ne.s32.totalorder %s78, %s79
      %p88 = scmp.eq.s32.totalorder %s26, 0
      %p89 = por %p87, %p88
      %p90 = scmp.ne.s32.totalorder %s78, %s79
      %p91 = scmp.eq.s32.totalorder %s27, 1
      %p92 = por %p90, %p91
      %p94 = scmp.ne.s32.totalorder %s79, %s93
      %p95 = scmp.eq.s32.totalorder %s27, 0
      %p96 = por %p94, %p95
      %s98 = sadd.s32 %s97, 1
      %p101 = scmp.eq.s32.totalorder %s21, 1
      %p102 = scmp.ne.s32.totalorder %s97, %s99
      %p103 = scmp.eq.s32.totalorder %s21, 0
      %p104 = por %p102, %p103
      %p105 = scmp.ne.s32.totalorder %s97, %s99
      %p106 = scmp.eq.s32.totalorder %s26, 1
      %p107 = por %p105, %p106
      %p108 = scmp.ne.s32.totalorder %s99, %s100
      %p109 = scmp.eq.s32.totalorder %s26, 0
      %p110 = por %p108, %p109
      %p111 = scmp.ne.s32.totalorder %s99, %s100
      %p112 = scmp.eq.s32.totalorder %s27, 1
      %p113 = por %p111, %p112
      %p115 = scmp.ne.s32.totalorder %s100, %s114
      %p116 = scmp.eq.s32.totalorder %s27, 0
      %p117 = por %p115, %p116
      %s119 = sadd.s32 %s118, 1
      %p122 = scmp.eq.s32.totalorder %s21, 1
      %p123 = scmp.ne.s32.totalorder %s118, %s120
      %p124 = scmp.eq.s32.totalorder %s21, 0
      %p125 = por %p123, %p124
      %p126 = scmp.ne.s32.totalorder %s118, %s120
      %p127 = scmp.eq.s32.totalorder %s26, 1
      %p128 = por %p126, %p127
      %p129 = scmp.ne.s32.totalorder %s120, %s121
      %p130 = scmp.eq.s32.totalorder %s26, 0
      %p131 = por %p129, %p130
      %p132 = scmp.ne.s32.totalorder %s120, %s121
      %p133 = scmp.eq.s32.totalorder %s27, 1
      %p134 = por %p132, %p133
      %p136 = scmp.ne.s32.totalorder %s121, %s135
      %p137 = scmp.eq.s32.totalorder %s27, 0
      %p138 = por %p136, %p137
      %s140 = sadd.s32 %s139, 1
      %p143 = scmp.eq.s32.totalorder %s21, 1
      %p144 = scmp.ne.s32.totalorder %s139, %s141
      %p145 = scmp.eq.s32.totalorder %s21, 0
      %p146 = por %p144, %p145
      %p147 = scmp.ne.s32.totalorder %s139, %s141
      %p148 = scmp.eq.s32.totalorder %s26, 1
      %p149 = por %p147, %p148
      %p150 = scmp.ne.s32.totalorder %s141, %s142
      %p151 = scmp.eq.s32.totalorder %s26, 0
      %p152 = por %p150, %p151
      %p153 = scmp.ne.s32.totalorder %s141, %s142
      %p154 = scmp.eq.s32.totalorder %s27, 1
      %p155 = por %p153, %p154
      %p157 = scmp.ne.s32.totalorder %s142, %s156
      %p158 = scmp.eq.s32.totalorder %s27, 0
      %p159 = por %p157, %p158
      %s161 = sadd.s32 %s160, 1
      %p164 = scmp.eq.s32.totalorder %s21, 1
      %p165 = scmp.ne.s32.totalorder %s160, %s162
      %p166 = scmp.eq.s32.totalorder %s21, 0
      %p167 = por %p165, %p166
      %p168 = scmp.ne.s32.totalorder %s160, %s162
      %p169 = scmp.eq.s32.totalorder %s26, 1
      %p170 = por %p168, %p169
      %p171 = scmp.ne.s32.totalorder %s162, %s163
      %p172 = scmp.eq.s32.totalorder %s26, 0
      %p173 = por %p171, %p172
      %p174 = scmp.ne.s32.totalorder %s162, %s163
      %p175 = scmp.eq.s32.totalorder %s27, 1
      %p176 = por %p174, %p175
      %p178 = scmp.ne.s32.totalorder %s163, %s177
      %p179 = scmp.eq.s32.totalorder %s27, 0
      %p180 = por %p178, %p179
      %s182 = sadd.s32 %s181, 1
      %p185 = scmp.eq.s32.totalorder %s21, 1
      %p186 = scmp.ne.s32.totalorder %s181, %s183
      %p187 = scmp.eq.s32.totalorder %s21, 0
      %p188 = por %p186, %p187
      %p189 = scmp.ne.s32.totalorder %s181, %s183
      %p190 = scmp.eq.s32.totalorder %s26, 1
      %p191 = por %p189, %p190
      %p192 = scmp.ne.s32.totalorder %s183, %s184
      %p193 = scmp.eq.s32.totalorder %s26, 0
      %p194 = por %p192, %p193
      %p195 = scmp.ne.s32.totalorder %s183, %s184
      %p196 = scmp.eq.s32.totalorder %s27, 1
      %p197 = por %p195, %p196
      %p199 = scmp.ne.s32.totalorder %s184, %s198
      %p200 = scmp.eq.s32.totalorder %s27, 0
      %p201 = por %p199, %p200
      %s203 = sadd.s32 %s202, 1
      %p206 = scmp.eq.s32.totalorder %s21, 1
      %p207 = scmp.ne.s32.totalorder %s202, %s204
      %p208 = scmp.eq.s32.totalorder %s21, 0
      %p209 = por %p207, %p208
      %p210 = scmp.ne.s32.totalorder %s202, %s204
      %p211 = scmp.eq.s32.totalorder %s26, 1
      %p212 = por %p210, %p211
      %p213 = scmp.ne.s32.totalorder %s204, %s205
      %p214 = scmp.eq.s32.totalorder %s26, 0
      %p215 = por %p213, %p214
      %p216 = scmp.ne.s32.totalorder %s204, %s205
      %p217 = scmp.eq.s32.totalorder %s27, 1
      %p218 = por %p216, %p217
      %p220 = scmp.ne.s32.totalorder %s205, %s219
      %p221 = scmp.eq.s32.totalorder %s27, 0
      %p222 = por %p220, %p221
      %s223 = ssub.s32 %s21, %s28
      %p224 = scmp.eq.s32.totalorder %s223, 0
      %s226 = sadd.s32 %s225, 1
      %s227 = scalar_select %p224, %s225, %s226
      %p230 = pneg %p224
      %p231 = scmp.eq.s32.totalorder %s21, 1
      %p232 = por %p230, %p231
      %p233 = scmp.ne.s32.totalorder %s225, %s228
      %p234 = scmp.eq.s32.totalorder %s21, 0
      %p235 = por %p233, %p234
      %p236 = scmp.ne.s32.totalorder %s225, %s228
      %p237 = scmp.eq.s32.totalorder %s26, 1
      %p238 = por %p236, %p237
      %p239 = scmp.ne.s32.totalorder %s228, %s229
      %p240 = scmp.eq.s32.totalorder %s26, 0
      %p241 = por %p239, %p240
      %p242 = scmp.ne.s32.totalorder %s228, %s229
      %p243 = scmp.eq.s32.totalorder %s27, 1
      %p244 = por %p242, %p243
      %p246 = scmp.ne.s32.totalorder %s229, %s245
      %p247 = scmp.eq.s32.totalorder %s27, 0
      %p248 = por %p246, %p247
      %p249 = scmp.le.s32.totalorder 1, %s21
      %p250 = scmp.lt.s32.totalorder %s21, 3
      %p251 = pnand %p249, %p250
      %p252 = pneg %p251
      // Predicated region
      $region9: #{tpu_custom_call.1} parent=5 // pred_check
        _
      $region10: #{tpu_custom_call.1} parent=5 // pred_check_branch
        %254 = sbr.rel (%p251) target = $region12
      $region11: #{tpu_custom_call.1} parent=5 // pred_region
        %s255 = ssub.s32 %s21, 1
        // Predicated region
        $region13: #{tpu_custom_call.1} parent=11 // pred_check
          %p256 = pneg %p68
        $region14: #{tpu_custom_call.1} parent=11 // pred_check_branch
          %258 = sbr.rel (%p256) target = $region16
        $region15: #{tpu_custom_call.1} parent=11 // pred_region
          _
        $region16: #{tpu_custom_call.1} parent=11 // pred_fallthru
          _
        // Predicated region
        $region17: #{tpu_custom_call.1} parent=11 // pred_check
          %p259 = pneg %p89
        $region18: #{tpu_custom_call.1} parent=11 // pred_check_branch
          %261 = sbr.rel (%p259) target = $region20
        $region19: #{tpu_custom_call.1} parent=11 // pred_region
          _
        $region20: #{tpu_custom_call.1} parent=11 // pred_fallthru
          _
        // Predicated region
        $region21: #{tpu_custom_call.1} parent=11 // pred_check
          %p262 = pneg %p110
        $region22: #{tpu_custom_call.1} parent=11 // pred_check_branch
          %264 = sbr.rel (%p262) target = $region24
        $region23: #{tpu_custom_call.1} parent=11 // pred_region
          _
        $region24: #{tpu_custom_call.1} parent=11 // pred_fallthru
          _
        // Predicated region
        $region25: #{tpu_custom_call.1} parent=11 // pred_check
          %p265 = pneg %p131
        $region26: #{tpu_custom_call.1} parent=11 // pred_check_branch
          %267 = sbr.rel (%p265) target = $region28
        $region27: #{tpu_custom_call.1} parent=11 // pred_region
          _
        $region28: #{tpu_custom_call.1} parent=11 // pred_fallthru
          _
        // Predicated region
        $region29: #{tpu_custom_call.1} parent=11 // pred_check
          %p268 = pneg %p152
        $region30: #{tpu_custom_call.1} parent=11 // pred_check_branch
          %270 = sbr.rel (%p268) target = $region32
        $region31: #{tpu_custom_call.1} parent=11 // pred_region
          _
        $region32: #{tpu_custom_call.1} parent=11 // pred_fallthru
          _
        // Predicated region
        $region33: #{tpu_custom_call.1} parent=11 // pred_check
          %p271 = pneg %p173
        $region34: #{tpu_custom_call.1} parent=11 // pred_check_branch
          %273 = sbr.rel (%p271) target = $region36
        $region35: #{tpu_custom_call.1} parent=11 // pred_region
          _
        $region36: #{tpu_custom_call.1} parent=11 // pred_fallthru
          _
        // Predicated region
        $region37: #{tpu_custom_call.1} parent=11 // pred_check
          %p274 = pneg %p194
        $region38: #{tpu_custom_call.1} parent=11 // pred_check_branch
          %276 = sbr.rel (%p274) target = $region40
        $region39: #{tpu_custom_call.1} parent=11 // pred_region
          _
        $region40: #{tpu_custom_call.1} parent=11 // pred_fallthru
          _
        // Predicated region
        $region41: #{tpu_custom_call.1} parent=11 // pred_check
          %p277 = pneg %p215
        $region42: #{tpu_custom_call.1} parent=11 // pred_check_branch
          %279 = sbr.rel (%p277) target = $region44
        $region43: #{tpu_custom_call.1} parent=11 // pred_region
          _
        $region44: #{tpu_custom_call.1} parent=11 // pred_fallthru
          _
      $region12: #{tpu_custom_call.1} parent=5 // pred_fallthru
        _
      %p280 = scmp.lt.s32.totalorder %s21, 2
      // Predicated region
      $region45: #{tpu_custom_call.1} parent=5 // pred_check
        %p281 = pneg %p280
      $region46: #{tpu_custom_call.1} parent=5 // pred_check_branch
        %283 = sbr.rel (%p281) target = $region48
      $region47: #{tpu_custom_call.1} parent=5 // pred_region
        // Predicated region
        $region49: #{tpu_custom_call.1} parent=47 // pred_check
          %p284 = pneg %p41
        $region50: #{tpu_custom_call.1} parent=47 // pred_check_branch
          %286 = sbr.rel (%p284) target = $region52
        $region51: #{tpu_custom_call.1} parent=47 // pred_region
          %s287 = sand.u32 %s31, 1
          %s288 = scalar_lea.sflag [#allocation3], %s287
          %s289 = sand.u32 %s31, 1
          %s290 = smul.addr %s289, 8
          %s291 = scalar_lea.vmem [#allocation2], %s290
          %293 = vsyncadd %s288, 0
          %s294 = smul.addr %s21, 8
          %s295 = scalar_lea.hbm %s0, %s294
          %s297 = sshll.u32 %s295, 4
          %s298 = int_to_ptr.hbm [resolvable:$true] %s297
          %s299 = sshll.u32 %s291, 4
          %s300 = int_to_ptr.vmem [resolvable:$true] %s299
          %302 = dma.hbm_to_vmem [thread:$0]  %s298, 128, %s300, %s288
        $region52: #{tpu_custom_call.1} parent=47 // pred_fallthru
          _
      $region48: #{tpu_custom_call.1} parent=5 // pred_fallthru
        _
      %p303 = scmp.le.s32.totalorder 1, %s21
      %p304 = scmp.lt.s32.totalorder %s21, 3
      %p305 = pnand %p303, %p304
      %p306 = pneg %p305
      // Predicated region
      $region53: #{tpu_custom_call.1} parent=5 // pred_check
        _
      $region54: #{tpu_custom_call.1} parent=5 // pred_check_branch
        %308 = sbr.rel (%p305) target = $region56
      $region55: #{tpu_custom_call.1} parent=5 // pred_region
        %s309 = ssub.s32 %s21, 1
        %s310 = sand.u32 %s34, 1
        %s311 = scalar_lea.sflag [#allocation3], %s310
        %s312 = sand.u32 %s34, 1
        %s313 = smul.addr %s312, 8
        %s314 = scalar_lea.vmem [#allocation2], %s313
        // Predicated region
        $region57: #{tpu_custom_call.1} parent=55 // pred_check
          %p315 = pneg %p47
        $region58: #{tpu_custom_call.1} parent=55 // pred_check_branch
          %317 = sbr.rel (%p315) target = $region60
        $region59: #{tpu_custom_call.1} parent=55 // pred_region
          %319 = dma.done %s311, 128
        $region60: #{tpu_custom_call.1} parent=55 // pred_fallthru
          _
        %s320 = sand.u32 %s34, 1
        %s321 = scalar_lea.sflag [#allocation3], %s320
        %s322 = sand.u32 %s34, 1
        %s323 = smul.addr %s322, 8
        %s324 = scalar_lea.vmem [#allocation2], %s323
        %p325 = pneg %p47
        %p326 = pneg %p44
        %p327 = pneg %p68
        %p328 = pneg %p65
        %p329 = pneg %p89
        %p330 = pneg %p86
        %p331 = pneg %p110
        %p332 = pneg %p107
        %p333 = pneg %p131
        %p334 = pneg %p128
        %p335 = pneg %p152
        %p336 = pneg %p149
        %p337 = pneg %p173
        %p338 = pneg %p170
        %p339 = pneg %p194
        %p340 = pneg %p191
        %p341 = pneg %p215
        %p342 = pneg %p212
        %p343 = pneg %p241
        %p344 = pneg %p238
        %s345 = sand.u32 %s228, 1
        %s346 = scalar_lea.sflag [#allocation4], %s345
        %s347 = sand.u32 %s228, 1
        %s348 = smul.addr %s347, 8
        %s349 = scalar_lea.vmem [#allocation5], %s348
        %v350 = vld [vmem:[%s314] sm:$0xff]
        %v351 = vld [vmem:[%s1] sm:$0xff]
        %v352 = vld [vmem:[%s1 + $0x8] sm:$0xff]
        %v353 = vld [vmem:[%s1 + $0x10] sm:$0xff]
        %v354 = vld [vmem:[%s1 + $0x18] sm:$0xff]
        %v355 = vld [vmem:[%s2] sm:$0x1]
        %v357 = vperm.slane %v355, 0
        %vm359 = vcmask 261120
        %v361 = vsel %vm359, %v350, 0
        %363 = vmatpush.msra.mxu0 0.0
        %364 = vmatpush.msra.mxu0 0.0
        %365 = vmatpush.msra.mxu0 0.0
        %366 = vmatpush.msra.mxu0 0.0
        %367 = vmatpush.msra.mxu0 0.0
        %368 = vmatpush.msra.mxu0 0.0
        %369 = vmatpush.msra.mxu0 0.0
        %370 = vmatpush.msra.mxu0 0.0
        %371 = vmatpush.msra.mxu0 0.0
        %372 = vmatpush.msra.mxu0 0.0
        %373 = vmatpush.msra.mxu0 0.0
        %374 = vmatpush.msra.mxu0 0.0
        %375 = vmatpush.msra.mxu0 %v354
        %376 = vmatpush.msra.mxu0 %v353
        %377 = vmatpush.msra.mxu0 %v352
        %378 = vmatpush.msra.mxu0 %v351
        %379 = vmatmul.f32.gmra.mxu0 %v361
        %v380 = vpop.f32.mrf.mxu0
        %v381 = vadd.f32 %v357, %v380
        %382 = vdwg.mxu0
        %v383 = vmul.f32 %v381, 0.35355338
        %385 = vrot.lane.b32.xlu0 %v381, 96
        %v386 = vpop.permute.xlu0 %385
        %vm387 = vcmask 64512
        %v389 = vsel %vm387, %v383, 0
        %v391 = vsel %vm387, %v386, 0
        %393 = vmatpush.xpose.msra.mxu0 0.0
        %394 = vmatpush.xpose.msra.mxu0 0.0
        %395 = vmatpush.xpose.msra.mxu0 0.0
        %396 = vmatpush.xpose.msra.mxu0 0.0
        %397 = vmatpush.xpose.msra.mxu0 0.0
        %398 = vmatpush.xpose.msra.mxu0 0.0
        %399 = vmatpush.xpose.msra.mxu0 0.0
        %400 = vmatpush.xpose.msra.mxu0 0.0
        %401 = vmatpush.xpose.msra.mxu0 0.0
        %402 = vmatpush.xpose.msra.mxu0 0.0
        %403 = vmatpush.xpose.msra.mxu0 0.0
        %404 = vmatpush.xpose.msra.mxu0 0.0
        %405 = vmatpush.xpose.msra.mxu0 0.0
        %406 = vmatpush.xpose.msra.mxu0 0.0
        %407 = vmatpush.xpose.msra.mxu0 0.0
        %408 = vmatpush.xpose.msra.mxu0 %v391
        %409 = vmatmul.f32.gmra.mxu0 %v389
        %v410 = vpop.f32.mrf.mxu0
        %v411 = vadd.f32 0.0, %v410
        %412 = vdwg.mxu0
        %v413 = vsel %vm387, %v411, -inf
        %414 = vmax.xlane.f32.xlu0 %v413
        %v415 = vpop.xlane.xlu0 %414
        %v416 = vsub.f32 %v411, %v415
        %v417 = vmul.f32 %v416, 1.442695
        %v418 = vpow.pop %v417
        %v419 = vsel %vm387, %v418, 0.0
        %420 = vadd.xlane.f32.xlu0 %v419
        %v421 = vpop.xlane.xlu0 %420
        %v422 = vrcp.pop %v421
        %423 = vrot.lane.b32.xlu0 %v381, 64
        %v424 = vpop.permute.xlu0 %423
        %v427 = vsel %vm387, %v418, 0
        %429 = vmatpush.msra.mxu0 0.0
        %430 = vmatpush.msra.mxu0 0.0
        %431 = vmatpush.msra.mxu0 0.0
        %432 = vmatpush.msra.mxu0 0.0
        %433 = vmatpush.msra.mxu0 0.0
        %434 = vmatpush.msra.mxu0 0.0
        %435 = vmatpush.msra.mxu0 0.0
        %436 = vmatpush.msra.mxu0 0.0
        %437 = vmatpush.msra.mxu0 0.0
        %438 = vmatpush.msra.mxu0 0.0
        %439 = vmatpush.msra.mxu0 0.0
        %440 = vmatpush.msra.mxu0 0.0
        %441 = vmatpush.msra.mxu0 0.0
        %442 = vmatpush.msra.mxu0 0.0
        %443 = vmatpush.msra.mxu0 0.0
        %444 = vmatpush.msra.mxu0 %v424
        %445 = vmatmul.f32.gmra.mxu0 %v427
        %v446 = vpop.f32.mrf.mxu0
        %v447 = vadd.f32 0.0, %v446
        %448 = vdwg.mxu0
        %v449 = vmul.f32 %v447, %v422
        %v450 = vld [vmem:[%s3] sm:$0xff]
        %451 = vrot.lane.b32.xlu0 %v383, 120
        %v452 = vpop.permute.xlu0 %451
        %453 = vrot.lane.b32.xlu0 %v381, 88
        %v454 = vpop.permute.xlu0 %453
        %v455 = vsel %vm387, %v452, 0
        %v457 = vsel %vm387, %v454, 0
        %459 = vmatpush.xpose.msra.mxu0 0.0
        %460 = vmatpush.xpose.msra.mxu0 0.0
        %461 = vmatpush.xpose.msra.mxu0 0.0
        %462 = vmatpush.xpose.msra.mxu0 0.0
        %463 = vmatpush.xpose.msra.mxu0 0.0
        %464 = vmatpush.xpose.msra.mxu0 0.0
        %465 = vmatpush.xpose.msra.mxu0 0.0
        %466 = vmatpush.xpose.msra.mxu0 0.0
        %467 = vmatpush.xpose.msra.mxu0 0.0
        %468 = vmatpush.xpose.msra.mxu0 0.0
        %469 = vmatpush.xpose.msra.mxu0 0.0
        %470 = vmatpush.xpose.msra.mxu0 0.0
        %471 = vmatpush.xpose.msra.mxu0 0.0
        %472 = vmatpush.xpose.msra.mxu0 0.0
        %473 = vmatpush.xpose.msra.mxu0 0.0
        %474 = vmatpush.xpose.msra.mxu0 %v457
        %475 = vmatmul.f32.gmra.mxu0 %v455
        %v476 = vpop.f32.mrf.mxu0
        %v477 = vadd.f32 0.0, %v476
        %478 = vdwg.mxu0
        %v479 = vsel %vm387, %v477, -inf
        %480 = vmax.xlane.f32.xlu0 %v479
        %v481 = vpop.xlane.xlu0 %480
        %v482 = vsub.f32 %v477, %v481
        %v483 = vmul.f32 %v482, 1.442695
        %v484 = vpow.pop %v483
        %v485 = vsel %vm387, %v484, 0.0
        %486 = vadd.xlane.f32.xlu0 %v485
        %v487 = vpop.xlane.xlu0 %486
        %v488 = vrcp.pop %v487
        %489 = vrot.lane.b32.xlu0 %v381, 56
        %v490 = vpop.permute.xlu0 %489
        %v493 = vsel %vm387, %v484, 0
        %495 = vmatpush.msra.mxu0 0.0
        %496 = vmatpush.msra.mxu0 0.0
        %497 = vmatpush.msra.mxu0 0.0
        %498 = vmatpush.msra.mxu0 0.0
        %499 = vmatpush.msra.mxu0 0.0
        %500 = vmatpush.msra.mxu0 0.0
        %501 = vmatpush.msra.mxu0 0.0
        %502 = vmatpush.msra.mxu0 0.0
        %503 = vmatpush.msra.mxu0 0.0
        %504 = vmatpush.msra.mxu0 0.0
        %505 = vmatpush.msra.mxu0 0.0
        %506 = vmatpush.msra.mxu0 0.0
        %507 = vmatpush.msra.mxu0 0.0
        %508 = vmatpush.msra.mxu0 0.0
        %509 = vmatpush.msra.mxu0 0.0
        %510 = vmatpush.msra.mxu0 %v490
        %511 = vmatmul.f32.gmra.mxu0 %v493
        %v512 = vpop.f32.mrf.mxu0
        %v513 = vadd.f32 0.0, %v512
        %514 = vdwg.mxu0
        %v515 = vmul.f32 %v513, %v488
        %s516 = scalar_lea.vmem %s3, 8
        %v517 = vld [vmem:[%s516] sm:$0xff]
        %v519 = vsel %vm387, %v515, 0
        %521 = vmatpush.msra.mxu0 0.0
        %522 = vmatpush.msra.mxu0 0.0
        %523 = vmatpush.msra.mxu0 0.0
        %524 = vmatpush.msra.mxu0 0.0
        %525 = vmatpush.msra.mxu0 0.0
        %526 = vmatpush.msra.mxu0 0.0
        %527 = vmatpush.msra.mxu0 0.0
        %528 = vmatpush.msra.mxu0 0.0
        %529 = vmatpush.msra.mxu0 0.0
        %530 = vmatpush.msra.mxu0 0.0
        %531 = vmatpush.msra.mxu0 0.0
        %532 = vmatpush.msra.mxu0 0.0
        %533 = vmatpush.msra.mxu0 0.0
        %534 = vmatpush.msra.mxu0 0.0
        %535 = vmatpush.msra.mxu0 0.0
        %536 = vmatpush.msra.mxu0 %v517
        %537 = vmatmul.f32.gmra.mxu0 %v519
        %v538 = vpop.f32.mrf.mxu0
        %v539 = vadd.f32 0.0, %v538
        %540 = vdwg.mxu0
        %v542 = vsel %vm387, %v449, 0
        %544 = vmatpush.msra.mxu0 0.0
        %545 = vmatpush.msra.mxu0 0.0
        %546 = vmatpush.msra.mxu0 0.0
        %547 = vmatpush.msra.mxu0 0.0
        %548 = vmatpush.msra.mxu0 0.0
        %549 = vmatpush.msra.mxu0 0.0
        %550 = vmatpush.msra.mxu0 0.0
        %551 = vmatpush.msra.mxu0 0.0
        %552 = vmatpush.msra.mxu0 0.0
        %553 = vmatpush.msra.mxu0 0.0
        %554 = vmatpush.msra.mxu0 0.0
        %555 = vmatpush.msra.mxu0 0.0
        %556 = vmatpush.msra.mxu0 0.0
        %557 = vmatpush.msra.mxu0 0.0
        %558 = vmatpush.msra.mxu0 0.0
        %559 = vmatpush.msra.mxu0 %v450
        %560 = vmatmul.f32.gmra.mxu0 %v542
        %v561 = vpop.f32.mrf.mxu0
        %v562 = vadd.f32 %v539, %v561
        %563 = vdwg.mxu0
        %564 = vrot.lane.b32.xlu0 %v383, 112
        %v565 = vpop.permute.xlu0 %564
        %566 = vrot.lane.b32.xlu0 %v381, 80
        %v567 = vpop.permute.xlu0 %566
        %v568 = vsel %vm387, %v565, 0
        %v570 = vsel %vm387, %v567, 0
        %572 = vmatpush.xpose.msra.mxu0 0.0
        %573 = vmatpush.xpose.msra.mxu0 0.0
        %574 = vmatpush.xpose.msra.mxu0 0.0
        %575 = vmatpush.xpose.msra.mxu0 0.0
        %576 = vmatpush.xpose.msra.mxu0 0.0
        %577 = vmatpush.xpose.msra.mxu0 0.0
        %578 = vmatpush.xpose.msra.mxu0 0.0
        %579 = vmatpush.xpose.msra.mxu0 0.0
        %580 = vmatpush.xpose.msra.mxu0 0.0
        %581 = vmatpush.xpose.msra.mxu0 0.0
        %582 = vmatpush.xpose.msra.mxu0 0.0
        %583 = vmatpush.xpose.msra.mxu0 0.0
        %584 = vmatpush.xpose.msra.mxu0 0.0
        %585 = vmatpush.xpose.msra.mxu0 0.0
        %586 = vmatpush.xpose.msra.mxu0 0.0
        %587 = vmatpush.xpose.msra.mxu0 %v570
        %588 = vmatmul.f32.gmra.mxu0 %v568
        %v589 = vpop.f32.mrf.mxu0
        %v590 = vadd.f32 0.0, %v589
        %591 = vdwg.mxu0
        %v592 = vsel %vm387, %v590, -inf
        %593 = vmax.xlane.f32.xlu0 %v592
        %v594 = vpop.xlane.xlu0 %593
        %v595 = vsub.f32 %v590, %v594
        %v596 = vmul.f32 %v595, 1.442695
        %v597 = vpow.pop %v596
        %v598 = vsel %vm387, %v597, 0.0
        %599 = vadd.xlane.f32.xlu0 %v598
        %v600 = vpop.xlane.xlu0 %599
        %v601 = vrcp.pop %v600
        %602 = vrot.lane.b32.xlu0 %v381, 48
        %v603 = vpop.permute.xlu0 %602
        %v606 = vsel %vm387, %v597, 0
        %608 = vmatpush.msra.mxu0 0.0
        %609 = vmatpush.msra.mxu0 0.0
        %610 = vmatpush.msra.mxu0 0.0
        %611 = vmatpush.msra.mxu0 0.0
        %612 = vmatpush.msra.mxu0 0.0
        %613 = vmatpush.msra.mxu0 0.0
        %614 = vmatpush.msra.mxu0 0.0
        %615 = vmatpush.msra.mxu0 0.0
        %616 = vmatpush.msra.mxu0 0.0
        %617 = vmatpush.msra.mxu0 0.0
        %618 = vmatpush.msra.mxu0 0.0
        %619 = vmatpush.msra.mxu0 0.0
        %620 = vmatpush.msra.mxu0 0.0
        %621 = vmatpush.msra.mxu0 0.0
        %622 = vmatpush.msra.mxu0 0.0
        %623 = vmatpush.msra.mxu0 %v603
        %624 = vmatmul.f32.gmra.mxu0 %v606
        %v625 = vpop.f32.mrf.mxu0
        %v626 = vadd.f32 0.0, %v625
        %627 = vdwg.mxu0
        %v628 = vmul.f32 %v626, %v601
        %s629 = scalar_lea.vmem %s3, 16
        %v630 = vld [vmem:[%s629] sm:$0xff]
        %v632 = vsel %vm387, %v628, 0
        %634 = vmatpush.msra.mxu0 0.0
        %635 = vmatpush.msra.mxu0 0.0
        %636 = vmatpush.msra.mxu0 0.0
        %637 = vmatpush.msra.mxu0 0.0
        %638 = vmatpush.msra.mxu0 0.0
        %639 = vmatpush.msra.mxu0 0.0
        %640 = vmatpush.msra.mxu0 0.0
        %641 = vmatpush.msra.mxu0 0.0
        %642 = vmatpush.msra.mxu0 0.0
        %643 = vmatpush.msra.mxu0 0.0
        %644 = vmatpush.msra.mxu0 0.0
        %645 = vmatpush.msra.mxu0 0.0
        %646 = vmatpush.msra.mxu0 0.0
        %647 = vmatpush.msra.mxu0 0.0
        %648 = vmatpush.msra.mxu0 0.0
        %649 = vmatpush.msra.mxu0 %v630
        %650 = vmatmul.f32.gmra.mxu0 %v632
        %v651 = vpop.f32.mrf.mxu0
        %v652 = vadd.f32 0.0, %v651
        %653 = vdwg.mxu0
        %v654 = vadd.f32 %v562, %v652
        %655 = vrot.lane.b32.xlu0 %v383, 104
        %v656 = vpop.permute.xlu0 %655
        %657 = vrot.lane.b32.xlu0 %v381, 72
        %v658 = vpop.permute.xlu0 %657
        %v659 = vsel %vm387, %v656, 0
        %v661 = vsel %vm387, %v658, 0
        %663 = vmatpush.xpose.msra.mxu0 0.0
        %664 = vmatpush.xpose.msra.mxu0 0.0
        %665 = vmatpush.xpose.msra.mxu0 0.0
        %666 = vmatpush.xpose.msra.mxu0 0.0
        %667 = vmatpush.xpose.msra.mxu0 0.0
        %668 = vmatpush.xpose.msra.mxu0 0.0
        %669 = vmatpush.xpose.msra.mxu0 0.0
        %670 = vmatpush.xpose.msra.mxu0 0.0
        %671 = vmatpush.xpose.msra.mxu0 0.0
        %672 = vmatpush.xpose.msra.mxu0 0.0
        %673 = vmatpush.xpose.msra.mxu0 0.0
        %674 = vmatpush.xpose.msra.mxu0 0.0
        %675 = vmatpush.xpose.msra.mxu0 0.0
        %676 = vmatpush.xpose.msra.mxu0 0.0
        %677 = vmatpush.xpose.msra.mxu0 0.0
        %678 = vmatpush.xpose.msra.mxu0 %v661
        %679 = vmatmul.f32.gmra.mxu0 %v659
        %v680 = vpop.f32.mrf.mxu0
        %v681 = vadd.f32 0.0, %v680
        %682 = vdwg.mxu0
        %v683 = vsel %vm387, %v681, -inf
        %684 = vmax.xlane.f32.xlu0 %v683
        %v685 = vpop.xlane.xlu0 %684
        %v686 = vsub.f32 %v681, %v685
        %v687 = vmul.f32 %v686, 1.442695
        %v688 = vpow.pop %v687
        %v689 = vsel %vm387, %v688, 0.0
        %690 = vadd.xlane.f32.xlu0 %v689
        %v691 = vpop.xlane.xlu0 %690
        %v692 = vrcp.pop %v691
        %693 = vrot.lane.b32.xlu0 %v381, 40
        %v694 = vpop.permute.xlu0 %693
        %v697 = vsel %vm387, %v688, 0
        %699 = vmatpush.msra.mxu0 0.0
        %700 = vmatpush.msra.mxu0 0.0
        %701 = vmatpush.msra.mxu0 0.0
        %702 = vmatpush.msra.mxu0 0.0
        %703 = vmatpush.msra.mxu0 0.0
        %704 = vmatpush.msra.mxu0 0.0
        %705 = vmatpush.msra.mxu0 0.0
        %706 = vmatpush.msra.mxu0 0.0
        %707 = vmatpush.msra.mxu0 0.0
        %708 = vmatpush.msra.mxu0 0.0
        %709 = vmatpush.msra.mxu0 0.0
        %710 = vmatpush.msra.mxu0 0.0
        %711 = vmatpush.msra.mxu0 0.0
        %712 = vmatpush.msra.mxu0 0.0
        %713 = vmatpush.msra.mxu0 0.0
        %714 = vmatpush.msra.mxu0 %v694
        %715 = vmatmul.f32.gmra.mxu0 %v697
        %v716 = vpop.f32.mrf.mxu0
        %v717 = vadd.f32 0.0, %v716
        %718 = vdwg.mxu0
        %v719 = vmul.f32 %v717, %v692
        %s720 = scalar_lea.vmem %s3, 24
        %v721 = vld [vmem:[%s720] sm:$0xff]
        %v723 = vsel %vm387, %v719, 0
        %725 = vmatpush.msra.mxu0 0.0
        %726 = vmatpush.msra.mxu0 0.0
        %727 = vmatpush.msra.mxu0 0.0
        %728 = vmatpush.msra.mxu0 0.0
        %729 = vmatpush.msra.mxu0 0.0
        %730 = vmatpush.msra.mxu0 0.0
        %731 = vmatpush.msra.mxu0 0.0
        %732 = vmatpush.msra.mxu0 0.0
        %733 = vmatpush.msra.mxu0 0.0
        %734 = vmatpush.msra.mxu0 0.0
        %735 = vmatpush.msra.mxu0 0.0
        %736 = vmatpush.msra.mxu0 0.0
        %737 = vmatpush.msra.mxu0 0.0
        %738 = vmatpush.msra.mxu0 0.0
        %739 = vmatpush.msra.mxu0 0.0
        %740 = vmatpush.msra.mxu0 %v721
        %741 = vmatmul.f32.gmra.mxu0 %v723
        %v742 = vpop.f32.mrf.mxu0
        %v743 = vadd.f32 0.0, %v742
        %744 = vdwg.mxu0
        %v745 = vadd.f32 %v654, %v743
        %v746 = vld [vmem:[%s4] sm:$0x1]
        %v748 = vperm.slane %v746, 0
        %v750 = vadd.f32 %v745, %v748
        %v751 = vadd.f32 %v350, %v750
        %v752 = vld [vmem:[%s5] sm:$0xff]
        %v753 = vld [vmem:[%s5 + $0x8] sm:$0xff]
        %v754 = vld [vmem:[%s5 + $0x10] sm:$0xff]
        %v755 = vld [vmem:[%s5 + $0x18] sm:$0xff]
        %v756 = vld [vmem:[%s6] sm:$0x1]
        %v758 = vperm.slane %v756, 0
        %v761 = vsel %vm359, %v751, 0
        %763 = vmatpush.msra.mxu0 0.0
        %764 = vmatpush.msra.mxu0 0.0
        %765 = vmatpush.msra.mxu0 0.0
        %766 = vmatpush.msra.mxu0 0.0
        %767 = vmatpush.msra.mxu0 0.0
        %768 = vmatpush.msra.mxu0 0.0
        %769 = vmatpush.msra.mxu0 0.0
        %770 = vmatpush.msra.mxu0 0.0
        %771 = vmatpush.msra.mxu0 0.0
        %772 = vmatpush.msra.mxu0 0.0
        %773 = vmatpush.msra.mxu0 0.0
        %774 = vmatpush.msra.mxu0 0.0
        %775 = vmatpush.msra.mxu0 %v755
        %776 = vmatpush.msra.mxu0 %v754
        %777 = vmatpush.msra.mxu0 %v753
        %778 = vmatpush.msra.mxu0 %v752
        %779 = vmatmul.f32.gmra.mxu0 %v761
        %v780 = vpop.f32.mrf.mxu0
        %v781 = vadd.f32 %v758, %v780
        %782 = vdwg.mxu0
        %v783 = vmax.f32 %v781, 0.0
        %v784 = vld [vmem:[%s7] sm:$0xff]
        %v785 = vld [vmem:[%s7 + $0x8] sm:$0xff]
        %v786 = vld [vmem:[%s7 + $0x10] sm:$0xff]
        %v787 = vld [vmem:[%s7 + $0x18] sm:$0xff]
        %v788 = vld [vmem:[%s7 + $0x20] sm:$0xff]
        %v789 = vld [vmem:[%s7 + $0x28] sm:$0xff]
        %v790 = vld [vmem:[%s7 + $0x30] sm:$0xff]
        %v791 = vld [vmem:[%s7 + $0x38] sm:$0xff]
        %v792 = vld [vmem:[%s8] sm:$0x1]
        %v794 = vperm.slane %v792, 0
        %vm796 = vcmask 523264
        %v798 = vsel %vm796, %v783, 0
        %800 = vmatpush.msra.mxu0 0.0
        %801 = vmatpush.msra.mxu0 0.0
        %802 = vmatpush.msra.mxu0 0.0
        %803 = vmatpush.msra.mxu0 0.0
        %804 = vmatpush.msra.mxu0 0.0
        %805 = vmatpush.msra.mxu0 0.0
        %806 = vmatpush.msra.mxu0 0.0
        %807 = vmatpush.msra.mxu0 0.0
        %808 = vmatpush.msra.mxu0 %v791
        %809 = vmatpush.msra.mxu0 %v790
        %810 = vmatpush.msra.mxu0 %v789
        %811 = vmatpush.msra.mxu0 %v788
        %812 = vmatpush.msra.mxu0 %v787
        %813 = vmatpush.msra.mxu0 %v786
        %814 = vmatpush.msra.mxu0 %v785
        %815 = vmatpush.msra.mxu0 %v784
        %816 = vmatmul.f32.gmra.mxu0 %v798
        %v817 = vpop.f32.mrf.mxu0
        %v818 = vadd.f32 %v794, %v817
        %819 = vdwg.mxu0
        %v820 = vadd.f32 %v751, %v818
        %821 = vst.msk [vmem:[%s349] sm:$0xff] %vm359, %v820
        %s822 = sand.u32 %s228, 1
        %s823 = scalar_lea.sflag [#allocation4], %s822
        %s824 = sand.u32 %s228, 1
        %s825 = smul.addr %s824, 8
        %s826 = scalar_lea.vmem [#allocation5], %s825
        // Predicated region
        $region61: #{tpu_custom_call.1} parent=55 // pred_check
          %p827 = pneg %p238
        $region62: #{tpu_custom_call.1} parent=55 // pred_check_branch
          %829 = sbr.rel (%p827) target = $region64
        $region63: #{tpu_custom_call.1} parent=55 // pred_region
          %831 = vsyncadd %s823, 0
          %s832 = smul.addr %s26, 8
          %s833 = scalar_lea.hbm %s9, %s832
          %s835 = sshll.u32 %s826, 4
          %s836 = int_to_ptr.vmem [resolvable:$true] %s835
          %s837 = sshll.u32 %s833, 4
          %s838 = int_to_ptr.hbm [resolvable:$true] %s837
          %840 = dma.vmem_to_hbm [thread:$0]  %s836, 128, %s838, %s823
        $region64: #{tpu_custom_call.1} parent=55 // pred_fallthru
          _
      $region56: #{tpu_custom_call.1} parent=5 // pred_fallthru
        _
      %p841 = scmp.le.s32.totalorder 2, %s21
      // Predicated region
      $region65: #{tpu_custom_call.1} parent=5 // pred_check
        %p842 = pneg %p841
      $region66: #{tpu_custom_call.1} parent=5 // pred_check_branch
        %844 = sbr.rel (%p842) target = $region68
      $region67: #{tpu_custom_call.1} parent=5 // pred_region
        %s845 = ssub.s32 %s21, 2
        // Predicated region
        $region69: #{tpu_custom_call.1} parent=67 // pred_check
          %p846 = pneg %p244
        $region70: #{tpu_custom_call.1} parent=67 // pred_check_branch
          %848 = sbr.rel (%p846) target = $region72
        $region71: #{tpu_custom_call.1} parent=67 // pred_region
          %s849 = sand.u32 %s229, 1
          %s850 = scalar_lea.sflag [#allocation4], %s849
          %s851 = sand.u32 %s229, 1
          %s852 = smul.addr %s851, 8
          %s853 = scalar_lea.vmem [#allocation5], %s852
          %855 = dma.done %s850, 128
        $region72: #{tpu_custom_call.1} parent=67 // pred_fallthru
          _
      $region68: #{tpu_custom_call.1} parent=5 // pred_fallthru
        _
    $region6: #{tpu_custom_call.1} parent=1 // loop_footer
      %s25 = sadd.s32 1, %s21
    $region7: #{tpu_custom_call.1} parent=1 // loop_footer_branch
      %20 = sbr.rel target = $region3
    $region8: #{tpu_custom_call.1} parent=1 // loop_exit
      _
    %856 = vsyncpa [#allocation3], 1
    %s857 = scalar_lea.sflag [#allocation3], 1
    %858 = vsyncpa %s857, 1
    %859 = vsyncpa [#allocation4], 1
    %s860 = scalar_lea.sflag [#allocation4], 1
    %861 = vsyncpa %s860, 1

</llo_original>
